<compile_context>
chip_gen: v7x
topology: tpu7x:2x2x1
jax: 0.10.0
libtpu: 0.0.40
codegen_flags: <defaults>
</compile_context>

<pallas_src>
import jax
import jax.numpy as jnp
from jax.experimental import pallas as pl
from jax.experimental.pallas import tpu as pltpu

_LANES = 128
_TARGET_BLOCK_BYTES = 4 * 1024 * 1024  # ~4 MiB per block per array


def _hsigmoidv2_kernel(x_ref, o_ref):
    # relu6(x + 3) / 6  (true division kept for bitwise parity with the
    # reference; swap for `* (1/6)` only if fused into a compute-bound epilogue)
    x = x_ref[...]
    o_ref[...] = jnp.clip(x + 3.0, 0.0, 6.0) / 6.0


def _round_up(v: int, m: int) -> int:
    return (v + m - 1) // m * m


def _sublanes_for(dtype) -> int:
    # Native second-minor tile: 8 rows for 4-byte, 16 for 2-byte, 32 for 1-byte.
    itemsize = jnp.dtype(dtype).itemsize
    return max(8, (8 * 4) // itemsize)


def _tensorcores_per_chip() -> int:
    # v7x has 2 TensorCores per chip; "parallel" grid axes shard across them.
    # v5e/v6e are single-TC -> splitting medium tensors only adds overhead.
    try:
        kind = jax.devices()[0].device_kind.lower()
    except Exception:
        return 1
    return 2 if "v7" in kind else 1


def hsigmoidv2(x: jax.Array, *, donate_input: bool = False) -> jax.Array:
    """Elementwise HSigmoidv2. Accepts any shape; tiles internally as (rows, 128)."""
    orig_shape = x.shape
    orig_dtype = x.dtype

    n = x.size
    if n == 0:
        return x

    itemsize = jnp.dtype(orig_dtype).itemsize
    sublanes = _sublanes_for(orig_dtype)

    # ---- layout: present a lane-dense (rows, 128) view ---------------------
    if n % _LANES == 0:
        # Fast path (any lane-aligned tensor, e.g. NCHW activations): pure
        # reshape, no pad/slice copies around the memory-bound kernel. Pallas
        # handles a ragged / partial last block, so rows need not be a
        # multiple of the sublane count.
        rows = n // _LANES
        x2d = x.reshape(rows, _LANES)
        padded = False
    else:
        # Truly non-lane-aligned sizes: pad only up to the next lane row.
        rows = pl.cdiv(n, _LANES)
        flat = jnp.pad(x.reshape(-1), (0, rows * _LANES - n))
        x2d = flat.reshape(rows, _LANES)
        padded = True

    # ---- tile choice --------------------------------------------------------
    # ~4 MiB blocks (dtype-aware row count), rounded to the native sublane
    # multiple. in + out double-buffered = 4 blocks = 16 MiB, fits all chips.
    tile = (_TARGET_BLOCK_BYTES // (_LANES * itemsize)) // sublanes * sublanes
    tile = max(tile, sublanes)

    num_tc = _tensorcores_per_chip()
    if num_tc >= 2:
        # v7x only: cap the tile so the parallel grid axis has >= num_tc steps
        # and work shards across both TensorCores.
        tile = min(tile, max(sublanes, _round_up(pl.cdiv(rows, num_tc), sublanes)))

    if tile >= rows:
        # Single block covering the whole array (full-dim block is always a
        # legal BlockSpec regardless of sublane divisibility).
        tile = rows

    grid = (pl.cdiv(rows, tile),)  # ragged last block handled by Pallas

    out2d = pl.pallas_call(
        _hsigmoidv2_kernel,
        out_shape=jax.ShapeDtypeStruct((rows, _LANES), orig_dtype),
        grid_spec=pltpu.PrefetchScalarGridSpec(
            num_scalar_prefetch=0,
            grid=grid,
            in_specs=[pl.BlockSpec((tile, _LANES), lambda i: (i, 0))],
            out_specs=pl.BlockSpec((tile, _LANES), lambda i: (i, 0)),
        ),
        compiler_params=pltpu.CompilerParams(
            dimension_semantics=("parallel",),
            # in + out, double-buffered at <= 4 MiB/block = <= 16 MiB;
            # set explicitly so the tiling stays portable on v5e defaults.
            vmem_limit_bytes=32 * 1024 * 1024,
        ),
        cost_estimate=pl.CostEstimate(
            flops=4 * n,
            transcendentals=0,
            bytes_accessed=2 * n * itemsize,
        ),
        # Alias only on the no-copy fast path; on the padded path the alias
        # would only donate the temporary padded buffer (no real saving).
        input_output_aliases={0: 0} if (donate_input and not padded) else {},
    )(x2d)

    if padded:
        return out2d.reshape(-1)[:n].reshape(orig_shape)
    return out2d.reshape(orig_shape)


def hsigmoidv2_ref(x: jax.Array) -> jax.Array:
    return jnp.clip(x + 3.0, 0.0, 6.0) / 6.0


if __name__ == "__main__":
    key = jax.random.PRNGKey(0)

    # NCHW input consistent with the module (batch=2, channels=4, 16x16).
    # numel = 2048 -> fast path (pure reshape), rows=16, single (or 2 on v7x)
    # grid step(s).
    x = jax.random.normal(key, (2, 4, 16, 16), dtype=jnp.float32) * 4.0
    out = jax.block_until_ready(hsigmoidv2(x))
    ref = hsigmoidv2_ref(x)
    assert out.shape == x.shape
    assert out.dtype == x.dtype
    assert jnp.allclose(out, ref, atol=1e-6, rtol=1e-6), "mismatch vs reference (fast path)"

    # Lane-aligned but rows not a multiple of 8 (rows=10): exercises the
    # widened no-pad fast path with a ragged / partial last block.
    x1 = jax.random.normal(jax.random.PRNGKey(2), (10, 128), dtype=jnp.float32) * 4.0
    out1 = jax.block_until_ready(hsigmoidv2(x1))
    assert jnp.allclose(out1, hsigmoidv2_ref(x1), atol=1e-6, rtol=1e-6), \
        "mismatch vs reference (ragged-rows fast path)"

    # Ragged shape to exercise the padded path (numel = 105, not lane-aligned).
    x2 = jax.random.normal(jax.random.PRNGKey(1), (3, 5, 7), dtype=jnp.float32) * 4.0
    out2 = jax.block_until_ready(hsigmoidv2(x2))
    ref2 = hsigmoidv2_ref(x2)
    assert out2.shape == x2.shape
    assert jnp.allclose(out2, ref2, atol=1e-6, rtol=1e-6), "mismatch vs reference (padded path)"

    # bf16 input: exercises dtype-aware sublane (16) / block-byte tiling.
    x3 = (jax.random.normal(jax.random.PRNGKey(3), (2, 4, 16, 16), dtype=jnp.float32) * 4.0
          ).astype(jnp.bfloat16)
    out3 = jax.block_until_ready(hsigmoidv2(x3))
    ref3 = hsigmoidv2_ref(x3)
    assert out3.dtype == jnp.bfloat16
    assert jnp.allclose(out3.astype(jnp.float32), ref3.astype(jnp.float32),
                        atol=1e-2, rtol=1e-2), "mismatch vs reference (bf16)"

    print("KERNEL_OK")
</pallas_src>

<mosaic_0001>
module attributes {stable_mosaic.version = 11 : i64} {
  func.func @_hsigmoidv2_kernel(%arg0: i32, %arg1: memref<16x128xf32, #tpu.memory_space<vmem>>, %arg2: memref<16x128xf32, #tpu.memory_space<vmem>>) attributes {dimension_semantics = [#tpu.dimension_semantics<parallel>], iteration_bounds = array<i64: 1>, scalar_prefetch = 0 : i64, scratch_operands = 0 : i64, tpu.core_type = #tpu.core_type<tc>, window_params = [{transform_indices = @transform_0, window_bounds = array<i64: 16, 128>}, {transform_indices = @transform_1, window_bounds = array<i64: 16, 128>}]} {
    %c0 = arith.constant 0 : index
    %c0_0 = arith.constant 0 : index
    %0 = vector.load %arg1[%c0, %c0_0] : memref<16x128xf32, #tpu.memory_space<vmem>>, vector<16x128xf32>
    %cst = arith.constant 3.000000e+00 : f32
    %1 = vector.broadcast %cst : f32 to vector<16x128xf32>
    %2 = arith.addf %0, %1 : vector<16x128xf32>
    %cst_1 = arith.constant 0.000000e+00 : f32
    %cst_2 = arith.constant 6.000000e+00 : f32
    %3 = vector.broadcast %cst_1 : f32 to vector<16x128xf32>
    %4 = arith.maximumf %3, %2 : vector<16x128xf32>
    %5 = vector.broadcast %cst_2 : f32 to vector<16x128xf32>
    %6 = arith.minimumf %5, %4 : vector<16x128xf32>
    %cst_3 = arith.constant 6.000000e+00 : f32
    %7 = vector.broadcast %cst_3 : f32 to vector<16x128xf32>
    %8 = arith.divf %6, %7 : vector<16x128xf32>
    %c0_4 = arith.constant 0 : index
    %c0_5 = arith.constant 0 : index
    %9 = vector.load %arg2[%c0_4, %c0_5] : memref<16x128xf32, #tpu.memory_space<vmem>>, vector<16x128xf32>
    tpu.vector_store %arg2[%c0_4, %c0_5], %8 {strides = array<i32>} : memref<16x128xf32, #tpu.memory_space<vmem>>, vector<16x128xf32>,
    return
  }
  func.func @transform_0(%arg0: i32) -> (i32, i32) {
    %c0_i32 = arith.constant 0 : i32
    %c0_i32_0 = arith.constant 0 : i32
    return %arg0, %c0_i32 : i32, i32
  }
  func.func @transform_1(%arg0: i32) -> (i32, i32) {
    %c0_i32 = arith.constant 0 : i32
    %c0_i32_0 = arith.constant 0 : i32
    return %arg0, %c0_i32 : i32, i32
  }
}

</mosaic_0001>

<llo_original>
// kernel: tpu_custom_call.1
$region0: #{tpu_custom_call.1}
  #allocation0 [shape = 'u32[]', space=smem, size = 0x4, offset = 0x4, fixed_abs, tag = 'smem constant byte address 0x4 - core index']
  #allocation1 [shape = 'u32[144,128]{1,0:T(1,128)}', space=vmem, size = 0x12000, scoped, tag = 'internal scratch']
  %s0 = inlined_call_operand.hbm [shape: f32[16,128], index: 0, kind: input, shape index: {}]
  %s1 = inlined_call_operand.hbm [shape: f32[16,128], index: 1, kind: output, shape index: {}]
  %s2 = sld [smem:[#allocation0]]
  $region18: #{tpu_custom_call.1} parent=0
    _
  %s4 = ssub.s32 1, %s2
  %s5 = scalar_select 0, %s4, %s2
  $region1: #{tpu_custom_call.1} parent=0
    #allocation2 [shape = 'u8[8192]{0}', space=vmem, size = 0x2000, scoped, tag = 'input window, operand 0, single buffered']
    #allocation3 [shape = 's32[1]{0}', space=sflag, size = 0x4, scoped, tag = 'scoped memory for tpu_custom_call.1']
    #allocation4 [shape = 's32[1]{0}', space=sflag, size = 0x4, scoped, tag = 'scoped memory for tpu_custom_call.1']
    #allocation5 [shape = 'u8[8192]{0}', space=vmem, size = 0x2000, scoped, tag = 'output window, operand 0, single buffered']
    %6 = vsyncpa [#allocation3], 0
    %7 = vsyncpa [#allocation4], 0
    // Predicated region
    $region2: #{tpu_custom_call.1} parent=1 // pred_check
      _
    $region3: #{tpu_custom_call.1} parent=1 // pred_check_branch
      %9 = sbr.rel (0) target = $region5
    $region4: #{tpu_custom_call.1} parent=1 // pred_region
      %s11 = ssub.s32 256, 256
      %12 = vsyncadd [#allocation3], %s11
      %s13 = sshll.u32 [#allocation2], 4
      %s14 = int_to_ptr.vmem [resolvable:$true] %s13
      %19 = dma.hbm_to_vmem [thread:$0]  %s0, 256, %s14, [#allocation3], 128, 128, 8
    $region5: #{tpu_custom_call.1} parent=1 // pred_fallthru
      _
    // Predicated region
    $region6: #{tpu_custom_call.1} parent=1 // pred_check
      _
    $region7: #{tpu_custom_call.1} parent=1 // pred_check_branch
      %21 = sbr.rel (0) target = $region9
    $region8: #{tpu_custom_call.1} parent=1 // pred_region
      %22 = dma.done [#allocation3], 256
    $region9: #{tpu_custom_call.1} parent=1 // pred_fallthru
      _
    %v23 = vld [vmem:[#allocation2] sm:$0xff]
    %v24 = vld [vmem:[#allocation2 + $0x8] sm:$0xff]
    %v25 = vadd.f32 %v23, 3.0
    %v26 = vadd.f32 %v24, 3.0
    %v27 = vmax.f32 %v25, 0.0
    %v28 = vmax.f32 %v26, 0.0
    %v29 = vmin.f32 %v27, 6.0
    %v30 = vmin.f32 %v28, 6.0
    %v31 = vrcp.pop 6.0
    %v32 = vmul.f32 %v29, %v31
    %v33 = vmul.f32 %v30, %v31
    %34 = vst [vmem:[#allocation5] sm:$0xff] %v32
    %35 = vst [vmem:[#allocation5 + $0x8] sm:$0xff] %v33
    // Predicated region
    $region10: #{tpu_custom_call.1} parent=1 // pred_check
      _
    $region11: #{tpu_custom_call.1} parent=1 // pred_check_branch
      %37 = sbr.rel (0) target = $region13
    $region12: #{tpu_custom_call.1} parent=1 // pred_region
      %s39 = ssub.s32 256, 256
      %40 = vsyncadd [#allocation4], %s39
      %s41 = sshll.u32 [#allocation5], 4
      %s42 = int_to_ptr.vmem [resolvable:$true] %s41
      %47 = dma.vmem_to_hbm [thread:$0]  %s42, 256, %s1, [#allocation4], 128, 128, 8
    $region13: #{tpu_custom_call.1} parent=1 // pred_fallthru
      _
    // Predicated region
    $region14: #{tpu_custom_call.1} parent=1 // pred_check
      _
    $region15: #{tpu_custom_call.1} parent=1 // pred_check_branch
      %49 = sbr.rel (0) target = $region17
    $region16: #{tpu_custom_call.1} parent=1 // pred_region
      %50 = dma.done [#allocation4], 256
    $region17: #{tpu_custom_call.1} parent=1 // pred_fallthru
      _
    %51 = vsyncpa [#allocation3], 1
    %52 = vsyncpa [#allocation4], 1

</llo_original>
